<compile_context>
chip_gen: v5e
topology: v5e:2x2
jax: 0.10.0
libtpu: 0.0.40
codegen_flags: <defaults>
</compile_context>

<pallas_src>
import jax
import jax.numpy as jnp
from jax import lax
from jax.experimental import pallas as pl
from jax.experimental.pallas import tpu as pltpu

N_TASKS = 1310            # output dim of the final Linear in ChemblCls
N_TASKS_PAD = 1536        # 12 * 128 -> lane-dense, divisible by TILE_N
TILE_N = 512              # task-dim column tile (3 grid steps)
BN_EPS = 1e-5

assert N_TASKS_PAD % TILE_N == 0


# --------------------------------------------------------------------------
# Kernel 1: Linear1 + BatchNorm1d (training-mode batch stats) + ReLU -> a1
# --------------------------------------------------------------------------
def _proj_bn_relu_kernel(h_ref, w1_ref, b1_ref, g_ref, bt_ref, a1_ref):
    # Linear 1 (bf16 MXU operands, f32 accumulation)
    z1 = jnp.dot(h_ref[...], w1_ref[...],
                 preferred_element_type=jnp.float32) + b1_ref[...]
    n = z1.shape[0]
    inv_n = 1.0 / n
    # One-pass batch statistics (biased variance), clamped against the
    # E[x^2]-E[x]^2 cancellation going slightly negative.
    mean = jnp.sum(z1, axis=0, keepdims=True) * inv_n
    mean_sq = jnp.sum(z1 * z1, axis=0, keepdims=True) * inv_n
    var = jnp.maximum(mean_sq - mean * mean, 0.0)
    # Fold normalize + affine into one scale/shift, then ReLU.
    scale = g_ref[...] * lax.rsqrt(var + BN_EPS)
    shift = bt_ref[...] - mean * scale
    a1_ref[...] = jnp.maximum(z1 * scale + shift, 0.0).astype(a1_ref.dtype)


# --------------------------------------------------------------------------
# Kernel 2: Linear2 + masked BCEWithLogits, per 512-wide task tile.
# Each grid step is independent ("parallel"): it writes a lane-dense
# (1, 1, TILE_N) row of batch-reduced partial loss sums.
# --------------------------------------------------------------------------
def _cls_loss_kernel(a1_ref, w2_ref, b2_ref, y_ref, loss_ref):
    pred = jnp.dot(a1_ref[...], w2_ref[...],
                   preferred_element_type=jnp.float32) + b2_ref[...]
    y = y_ref[...].astype(jnp.float32)
    target = (y + 1.0) * 0.5
    # numerically stable BCE-with-logits
    loss_mat = (jnp.maximum(pred, 0.0)
                - pred * target
                + jnp.log1p(jnp.exp(-jnp.abs(pred))))
    is_valid = y != 0.0                      # padded task columns have y == 0
    masked = jnp.where(is_valid, loss_mat, 0.0)
    # reduce over the batch axis only; the tiny (3, 1, 512) partials array is
    # summed by XLA in the wrapper.
    loss_ref[0] = jnp.sum(masked, axis=0, keepdims=True)


# --------------------------------------------------------------------------
# Wrapper
# --------------------------------------------------------------------------
def _round_up(x, m):
    return ((x + m - 1) // m) * m


def _pad_to(x, shape):
    pads = tuple((0, t - s) for s, t in zip(x.shape, shape))
    if all(p == (0, 0) for p in pads):
        return x
    return jnp.pad(x, pads)


def _vmem_limit_bytes(raw_bytes):
    # 2x for double-buffering + 4 MiB headroom; floor 32 MiB, cap 100 MiB.
    return int(min(max(2 * raw_bytes + (4 << 20), 32 << 20), 100 << 20))


def chembl_cls_loss(h_g, y, params):
    """h_g: (B, in_dim) bf16; y: (B, 1310) labels in {-1, 0, +1} (bf16)."""
    w1, b1, gamma, beta, w2, b2 = params
    B, in_dim = h_g.shape
    hidden = w1.shape[1]

    in_dim_p = _round_up(in_dim, 128)
    hidden_p = _round_up(hidden, 128)
    task_pad = N_TASKS_PAD - N_TASKS

    # Zero padding is semantically neutral:
    #   * padded in_dim rows/cols contribute 0 to Linear1,
    #   * padded hidden columns have z1 == 0, gamma == 0, beta == 0 -> a1 == 0,
    #     and padded W2 rows are 0,
    #   * padded task columns have y == 0 and are masked out of the loss.
    h_p = _pad_to(h_g, (B, in_dim_p)).astype(jnp.bfloat16)
    w1_p = _pad_to(w1, (in_dim_p, hidden_p))
    b1_p = _pad_to(b1, (1, hidden_p))
    gamma_p = _pad_to(gamma, (1, hidden_p))
    beta_p = _pad_to(beta, (1, hidden_p))
    w2_p = _pad_to(w2, (hidden_p, N_TASKS_PAD))
    b2_p = _pad_to(b2, (1, N_TASKS_PAD))
    y_p = _pad_to(y, (B, N_TASKS_PAD))

    # ---- Kernel 1: Linear1 + BN + ReLU -> a1 (bf16) -------------------------
    raw1 = (B * in_dim_p * 2            # h
            + in_dim_p * hidden_p * 2   # W1
            + 3 * hidden_p * 4          # b1, gamma, beta
            + B * hidden_p * 2          # a1 out
            + B * hidden_p * 4)         # z1 f32 intermediate
    a1 = pl.pallas_call(
        _proj_bn_relu_kernel,
        out_shape=jax.ShapeDtypeStruct((B, hidden_p), jnp.bfloat16),
        compiler_params=pltpu.CompilerParams(
            vmem_limit_bytes=_vmem_limit_bytes(raw1)),
    )(h_p, w1_p, b1_p, gamma_p, beta_p)

    # ---- Kernel 2: Linear2 + masked BCE per 512-wide task tile --------------
    num_tiles = N_TASKS_PAD // TILE_N
    raw2 = (B * hidden_p * 2            # a1 resident
            + hidden_p * TILE_N * 2     # W2 tile
            + TILE_N * 4                # b2 tile
            + B * TILE_N * 2            # y tile
            + 3 * B * TILE_N * 4        # f32 intermediates (pred/loss/mask)
            + TILE_N * 4)               # partial-loss output row
    partials = pl.pallas_call(
        _cls_loss_kernel,
        out_shape=jax.ShapeDtypeStruct((num_tiles, 1, TILE_N), jnp.float32),
        grid=(num_tiles,),
        in_specs=[
            pl.BlockSpec((B, hidden_p), lambda j: (0, 0)),        # a1 (resident)
            pl.BlockSpec((hidden_p, TILE_N), lambda j: (0, j)),   # W2 column tile
            pl.BlockSpec((1, TILE_N), lambda j: (0, j)),          # b2 column tile
            pl.BlockSpec((B, TILE_N), lambda j: (0, j)),          # y  column tile
        ],
        out_specs=pl.BlockSpec((1, 1, TILE_N), lambda j: (j, 0, 0)),
        compiler_params=pltpu.CompilerParams(
            dimension_semantics=("parallel",),   # independent tiles -> v7x megacore
            vmem_limit_bytes=_vmem_limit_bytes(raw2)),
    )(a1, w2_p, b2_p, y_p)

    # Valid-label count on the unpadded y (one cheap XLA reduce).
    valid_count = jnp.sum((y != 0).astype(jnp.float32))
    # NOTE: matches PyTorch semantics — NaN if the batch has no valid label.
    return jnp.sum(partials) / valid_count


def chembl_cls_loss_ref(h_g, y, params):
    """Pure-JAX reference mirroring the kernel's dtype/math choices."""
    w1, b1, gamma, beta, w2, b2 = params
    h = h_g.astype(jnp.float32)
    z1 = h @ w1.astype(jnp.float32) + b1
    mean = z1.mean(0, keepdims=True)
    var = jnp.maximum((z1 * z1).mean(0, keepdims=True) - mean * mean, 0.0)
    scale = gamma * lax.rsqrt(var + BN_EPS)
    shift = beta - mean * scale
    a1 = jnp.maximum(z1 * scale + shift, 0.0)
    a1 = a1.astype(jnp.bfloat16).astype(jnp.float32)   # kernel keeps a1 in bf16
    pred = a1 @ w2.astype(jnp.float32) + b2
    yf = y.astype(jnp.float32)
    target = (yf + 1.0) * 0.5
    lm = (jnp.maximum(pred, 0.0) - pred * target
          + jnp.log1p(jnp.exp(-jnp.abs(pred))))
    valid = yf != 0.0
    lm = jnp.where(valid, lm, 0.0)
    return jnp.sum(lm) / jnp.sum(valid.astype(jnp.float32))


def init_params(key, in_dim, hidden_dim):
    """Xavier-uniform weights (reset_parameters), zero biases, identity BN affine.
    Weights stored transposed vs. PyTorch ((in, out)) and in bf16 for the MXU."""
    k1, k2 = jax.random.split(key)
    bound1 = float(jnp.sqrt(6.0 / (in_dim + hidden_dim)))
    w1 = jax.random.uniform(k1, (in_dim, hidden_dim), jnp.float32,
                            -bound1, bound1).astype(jnp.bfloat16)
    b1 = jnp.zeros((1, hidden_dim), jnp.float32)
    gamma = jnp.ones((1, hidden_dim), jnp.float32)
    beta = jnp.zeros((1, hidden_dim), jnp.float32)
    bound2 = float(jnp.sqrt(6.0 / (hidden_dim + N_TASKS)))
    w2 = jax.random.uniform(k2, (hidden_dim, N_TASKS), jnp.float32,
                            -bound2, bound2).astype(jnp.bfloat16)
    b2 = jnp.zeros((1, N_TASKS), jnp.float32)
    return (w1, b1, gamma, beta, w2, b2)


if __name__ == "__main__":
    B, IN_DIM, HIDDEN = 8, 32, 32

    key = jax.random.PRNGKey(0)
    k_h, k_y, k_p = jax.random.split(key, 3)

    h_g = jax.random.normal(k_h, (B, IN_DIM), jnp.float32).astype(jnp.bfloat16)
    # labels in {-1, 0, +1}; 0 means "invalid / unlabeled" (exact in bf16)
    y = jax.random.randint(k_y, (B, N_TASKS), -1, 2).astype(jnp.bfloat16)

    params = init_params(k_p, IN_DIM, HIDDEN)

    loss = chembl_cls_loss(h_g, y, params)
    jax.block_until_ready(loss)

    assert bool(jnp.isfinite(loss)), "loss is not finite"

    ref = chembl_cls_loss_ref(h_g, y, params)
    rel_err = abs(float(loss) - float(ref)) / max(abs(float(ref)), 1e-6)
    assert rel_err < 2e-2, f"kernel={float(loss)} ref={float(ref)} rel_err={rel_err}"

    print("KERNEL_OK")
</pallas_src>

<mosaic_0001>
module attributes {stable_mosaic.version = 11 : i64} {
  func.func @_proj_bn_relu_kernel(%arg0: memref<8x128xbf16, #tpu.memory_space<vmem>>, %arg1: memref<128x128xbf16, #tpu.memory_space<vmem>>, %arg2: memref<1x128xf32, #tpu.memory_space<vmem>>, %arg3: memref<1x128xf32, #tpu.memory_space<vmem>>, %arg4: memref<1x128xf32, #tpu.memory_space<vmem>>, %arg5: memref<8x128xbf16, #tpu.memory_space<vmem>>) attributes {dimension_semantics = [], scalar_prefetch = 0 : i64, scratch_operands = 0 : i64, tpu.core_type = #tpu.core_type<tc>} {
    %c0 = arith.constant 0 : index
    %c0_0 = arith.constant 0 : index
    %0 = vector.load %arg0[%c0, %c0_0] : memref<8x128xbf16, #tpu.memory_space<vmem>>, vector<8x128xbf16>
    %c0_1 = arith.constant 0 : index
    %c0_2 = arith.constant 0 : index
    %1 = vector.load %arg1[%c0_1, %c0_2] : memref<128x128xbf16, #tpu.memory_space<vmem>>, vector<128x128xbf16>
    %cst = arith.constant dense<0.000000e+00> : vector<8x128xf32>
    %2 = tpu.matmul %0, %1, %cst {dimension_numbers = #tpu.dot_dimension_numbers<[1], [0], [0], [1], [0, 0, 1, 1], [], []>} : vector<8x128xbf16>, vector<128x128xbf16>, vector<8x128xf32> -> vector<8x128xf32>
    %c0_3 = arith.constant 0 : index
    %c0_4 = arith.constant 0 : index
    %3 = vector.load %arg2[%c0_3, %c0_4] : memref<1x128xf32, #tpu.memory_space<vmem>>, vector<1x128xf32>
    %4 = vector.broadcast %3 : vector<1x128xf32> to vector<8x128xf32>
    %5 = arith.addf %2, %4 : vector<8x128xf32>
    %cst_5 = arith.constant dense<0.000000e+00> : vector<128xf32>
    %6 = vector.multi_reduction <add>, %5, %cst_5 [0] : vector<8x128xf32> to vector<128xf32>
    %7 = vector.shape_cast %6 : vector<128xf32> to vector<1x128xf32>
    %cst_6 = arith.constant 1.250000e-01 : f32
    %8 = vector.broadcast %cst_6 : f32 to vector<1x128xf32>
    %9 = arith.mulf %7, %8 : vector<1x128xf32>
    %10 = arith.mulf %5, %5 : vector<8x128xf32>
    %cst_7 = arith.constant dense<0.000000e+00> : vector<128xf32>
    %11 = vector.multi_reduction <add>, %10, %cst_7 [0] : vector<8x128xf32> to vector<128xf32>
    %12 = vector.shape_cast %11 : vector<128xf32> to vector<1x128xf32>
    %cst_8 = arith.constant 1.250000e-01 : f32
    %13 = vector.broadcast %cst_8 : f32 to vector<1x128xf32>
    %14 = arith.mulf %12, %13 : vector<1x128xf32>
    %15 = arith.mulf %9, %9 : vector<1x128xf32>
    %16 = arith.subf %14, %15 : vector<1x128xf32>
    %cst_9 = arith.constant 0.000000e+00 : f32
    %17 = vector.broadcast %cst_9 : f32 to vector<1x128xf32>
    %18 = arith.maximumf %16, %17 : vector<1x128xf32>
    %c0_10 = arith.constant 0 : index
    %c0_11 = arith.constant 0 : index
    %19 = vector.load %arg3[%c0_10, %c0_11] : memref<1x128xf32, #tpu.memory_space<vmem>>, vector<1x128xf32>
    %cst_12 = arith.constant 9.99999974E-6 : f32
    %20 = vector.broadcast %cst_12 : f32 to vector<1x128xf32>
    %21 = arith.addf %18, %20 : vector<1x128xf32>
    %22 = math.rsqrt %21 : vector<1x128xf32>
    %23 = arith.mulf %19, %22 : vector<1x128xf32>
    %c0_13 = arith.constant 0 : index
    %c0_14 = arith.constant 0 : index
    %24 = vector.load %arg4[%c0_13, %c0_14] : memref<1x128xf32, #tpu.memory_space<vmem>>, vector<1x128xf32>
    %25 = arith.mulf %9, %23 : vector<1x128xf32>
    %26 = arith.subf %24, %25 : vector<1x128xf32>
    %27 = vector.broadcast %23 : vector<1x128xf32> to vector<8x128xf32>
    %28 = arith.mulf %5, %27 : vector<8x128xf32>
    %29 = vector.broadcast %26 : vector<1x128xf32> to vector<8x128xf32>
    %30 = arith.addf %28, %29 : vector<8x128xf32>
    %cst_15 = arith.constant 0.000000e+00 : f32
    %31 = vector.broadcast %cst_15 : f32 to vector<8x128xf32>
    %32 = arith.maximumf %30, %31 : vector<8x128xf32>
    %33 = arith.truncf %32 : vector<8x128xf32> to vector<8x128xbf16>
    %c0_16 = arith.constant 0 : index
    %c0_17 = arith.constant 0 : index
    %34 = vector.load %arg5[%c0_16, %c0_17] : memref<8x128xbf16, #tpu.memory_space<vmem>>, vector<8x128xbf16>
    tpu.vector_store %arg5[%c0_16, %c0_17], %33 {strides = array<i32>} : memref<8x128xbf16, #tpu.memory_space<vmem>>, vector<8x128xbf16>,
    return
  }
}

</mosaic_0001>

<llo_original>
// kernel: tpu_custom_call.1
$region0: #{tpu_custom_call.1}
  #allocation0 [shape = 'u32[]', space=smem, size = 0x4, offset = 0x4, fixed_abs, tag = 'smem constant byte address 0x4 - core index']
  #allocation1 [shape = 'u32[72,128]{1,0:T(1,128)}', space=vmem, size = 0x9000, scoped, tag = 'internal scratch']
  %s0 = inlined_call_operand.hbm [shape: bf16[8,128], index: 0, kind: input, shape index: {}]
  %s1 = inlined_call_operand.hbm [shape: bf16[128,128], index: 1, kind: input, shape index: {}]
  %s2 = inlined_call_operand.vmem [shape: f32[1,128], index: 2, kind: input, shape index: {}]
  %s3 = inlined_call_operand.vmem [shape: f32[1,128], index: 3, kind: input, shape index: {}]
  %s4 = inlined_call_operand.vmem [shape: f32[1,128], index: 4, kind: input, shape index: {}]
  %s5 = inlined_call_operand.hbm [shape: bf16[8,128], index: 5, kind: output, shape index: {}]
  %s6 = sld [smem:[#allocation0]]
  $region38: #{tpu_custom_call.1} parent=0
    _
  %s8 = ssub.s32 1, %s6
  %s9 = scalar_select 0, %s8, %s6
  $region1: #{tpu_custom_call.1} parent=0
    #allocation2 [shape = 'u8[2048]{0}', space=vmem, size = 0x800, scoped, tag = 'input window, operand 0, single buffered']
    #allocation3 [shape = 's32[1]{0}', space=sflag, size = 0x4, scoped, tag = 'scoped memory for tpu_custom_call.1']
    #allocation4 [shape = 's32[1]{0}', space=sflag, size = 0x4, scoped, tag = 'scoped memory for tpu_custom_call.1']
    #allocation5 [shape = 'u8[32768]{0}', space=vmem, size = 0x8000, scoped, tag = 'input window, operand 1, single buffered']
    #allocation6 [shape = 's32[1]{0}', space=sflag, size = 0x4, scoped, tag = 'scoped memory for tpu_custom_call.1']
    #allocation7 [shape = 'u8[2048]{0}', space=vmem, size = 0x800, scoped, tag = 'output window, operand 0, single buffered']
    %10 = vsyncpa [#allocation3], 0
    %11 = vsyncpa [#allocation6], 0
    %12 = vsyncpa [#allocation4], 0
    // Predicated region
    $region2: #{tpu_custom_call.1} parent=1 // pred_check
      _
    $region3: #{tpu_custom_call.1} parent=1 // pred_check_branch
      %14 = sbr.rel (0) target = $region5
    $region4: #{tpu_custom_call.1} parent=1 // pred_region
      %16 = vsyncadd [#allocation3], 0
      %s18 = sshll.u32 %s0, 4
      %s19 = int_to_ptr.hbm [resolvable:$true] %s18
      %s20 = sshll.u32 [#allocation2], 4
      %s21 = int_to_ptr.vmem [resolvable:$true] %s20
      %23 = dma.hbm_to_vmem [thread:$0]  %s19, 64, %s21, [#allocation3]
    $region5: #{tpu_custom_call.1} parent=1 // pred_fallthru
      _
    // Predicated region
    $region6: #{tpu_custom_call.1} parent=1 // pred_check
      _
    $region7: #{tpu_custom_call.1} parent=1 // pred_check_branch
      %25 = sbr.rel (0) target = $region9
    $region8: #{tpu_custom_call.1} parent=1 // pred_region
      %27 = vsyncadd [#allocation6], 0
      %s28 = sshll.u32 %s1, 4
      %s29 = int_to_ptr.hbm [resolvable:$true] %s28
      %s30 = sshll.u32 [#allocation5], 4
      %s31 = int_to_ptr.vmem [resolvable:$true] %s30
      %36 = dma.hbm_to_vmem [thread:$0]  %s29, 1024, %s31, [#allocation6], 64, 64, 4
    $region9: #{tpu_custom_call.1} parent=1 // pred_fallthru
      _
    // Predicated region
    $region10: #{tpu_custom_call.1} parent=1 // pred_check
      _
    $region11: #{tpu_custom_call.1} parent=1 // pred_check_branch
      %38 = sbr.rel (0) target = $region13
    $region12: #{tpu_custom_call.1} parent=1 // pred_region
      _
    $region13: #{tpu_custom_call.1} parent=1 // pred_fallthru
      _
    // Predicated region
    $region14: #{tpu_custom_call.1} parent=1 // pred_check
      _
    $region15: #{tpu_custom_call.1} parent=1 // pred_check_branch
      %40 = sbr.rel (0) target = $region17
    $region16: #{tpu_custom_call.1} parent=1 // pred_region
      _
    $region17: #{tpu_custom_call.1} parent=1 // pred_fallthru
      _
    // Predicated region
    $region18: #{tpu_custom_call.1} parent=1 // pred_check
      _
    $region19: #{tpu_custom_call.1} parent=1 // pred_check_branch
      %42 = sbr.rel (0) target = $region21
    $region20: #{tpu_custom_call.1} parent=1 // pred_region
      _
    $region21: #{tpu_custom_call.1} parent=1 // pred_fallthru
      _
    // Predicated region
    $region22: #{tpu_custom_call.1} parent=1 // pred_check
      _
    $region23: #{tpu_custom_call.1} parent=1 // pred_check_branch
      %44 = sbr.rel (0) target = $region25
    $region24: #{tpu_custom_call.1} parent=1 // pred_region
      %46 = dma.done [#allocation3], 64
    $region25: #{tpu_custom_call.1} parent=1 // pred_fallthru
      _
    // Predicated region
    $region26: #{tpu_custom_call.1} parent=1 // pred_check
      _
    $region27: #{tpu_custom_call.1} parent=1 // pred_check_branch
      %48 = sbr.rel (0) target = $region29
    $region28: #{tpu_custom_call.1} parent=1 // pred_region
      %50 = dma.done [#allocation6], 1024
    $region29: #{tpu_custom_call.1} parent=1 // pred_fallthru
      _
    %v51 = vld [vmem:[#allocation2] sm:$0xf]
    %v52 = vld [vmem:[#allocation5] sm:$0xf]
    %v53 = vld [vmem:[#allocation5 + $0x4] sm:$0xf]
    %v54 = vld [vmem:[#allocation5 + $0x8] sm:$0xf]
    %v55 = vld [vmem:[#allocation5 + $0xc] sm:$0xf]
    %v56 = vld [vmem:[#allocation5 + $0x10] sm:$0xf]
    %v57 = vld [vmem:[#allocation5 + $0x14] sm:$0xf]
    %v58 = vld [vmem:[#allocation5 + $0x18] sm:$0xf]
    %v59 = vld [vmem:[#allocation5 + $0x1c] sm:$0xf]
    %v60 = vld [vmem:[#allocation5 + $0x20] sm:$0xf]
    %v61 = vld [vmem:[#allocation5 + $0x24] sm:$0xf]
    %v62 = vld [vmem:[#allocation5 + $0x28] sm:$0xf]
    %v63 = vld [vmem:[#allocation5 + $0x2c] sm:$0xf]
    %v64 = vld [vmem:[#allocation5 + $0x30] sm:$0xf]
    %v65 = vld [vmem:[#allocation5 + $0x34] sm:$0xf]
    %v66 = vld [vmem:[#allocation5 + $0x38] sm:$0xf]
    %v67 = vld [vmem:[#allocation5 + $0x3c] sm:$0xf]
    %v68 = vld [vmem:[%s2] sm:$0x1]
    %v70 = vperm.slane %v68, 0
    %v88 = vunpack.c.l.b16 %v52
    %v89 = vunpack.c.l.b16 %v53
    %v90 = vunpack.c.l.b16 %v54
    %v91 = vunpack.c.l.b16 %v55
    %v92 = vunpack.c.l.b16 %v56
    %v93 = vunpack.c.l.b16 %v57
    %v94 = vunpack.c.l.b16 %v58
    %v95 = vunpack.c.l.b16 %v59
    %v96 = vunpack.c.l.b16 %v60
    %v97 = vunpack.c.l.b16 %v61
    %v98 = vunpack.c.l.b16 %v62
    %v99 = vunpack.c.l.b16 %v63
    %v100 = vunpack.c.l.b16 %v64
    %v101 = vunpack.c.l.b16 %v65
    %v102 = vunpack.c.l.b16 %v66
    %v103 = vunpack.c.l.b16 %v67
    %v104 = vpack.c.b16 %v89, %v88
    %v105 = vpack.c.b16 %v91, %v90
    %v106 = vpack.c.b16 %v93, %v92
    %v107 = vpack.c.b16 %v95, %v94
    %v108 = vpack.c.b16 %v97, %v96
    %v109 = vpack.c.b16 %v99, %v98
    %v110 = vpack.c.b16 %v101, %v100
    %v111 = vpack.c.b16 %v103, %v102
    %120 = vmatpush.bf16.msra.mxu0 %v111
    %121 = vmatpush.bf16.msra.mxu0 %v110
    %122 = vmatpush.bf16.msra.mxu0 %v109
    %123 = vmatpush.bf16.msra.mxu0 %v108
    %124 = vmatpush.bf16.msra.mxu0 %v107
    %125 = vmatpush.bf16.msra.mxu0 %v106
    %126 = vmatpush.bf16.msra.mxu0 %v105
    %127 = vmatpush.bf16.msra.mxu0 %v104
    %128 = vmatmul.bf16.gmra.mxu0 %v51
    %v129 = vpop.f32.mrf.mxu0
    %v130 = vadd.f32 %v70, %v129
    %v131 = vpop.f32.mrf.mxu0
    %132 = vdwg.mxu0
    %v133 = vrot.slane %v130, 4
    %v134 = vadd.f32 %v130, %v133
    %v135 = vrot.slane %v134, 2
    %v136 = vadd.f32 %v134, %v135
    %v137 = vrot.slane %v136, 1
    %v138 = vadd.f32 %v136, %v137
    %v139 = vmul.f32 %v138, 0.125
    %v140 = vmul.f32 %v130, %v130
    %v141 = vrot.slane %v140, 4
    %v142 = vadd.f32 %v140, %v141
    %v143 = vrot.slane %v142, 2
    %v144 = vadd.f32 %v142, %v143
    %v145 = vrot.slane %v144, 1
    %v146 = vadd.f32 %v144, %v145
    %v147 = vmul.f32 %v146, 0.125
    %v148 = vmul.f32 %v139, %v139
    %v149 = vsub.f32 %v147, %v148
    %v150 = vmax.f32 %v149, 0.0
    %v151 = vld [vmem:[%s3] sm:$0x1]
    %v152 = vadd.f32 %v150, 1e-05
    %v153 = vrsqrt.pop %v152
    %v154 = vmul.f32 %v153, %v152
    %v155 = vmul.f32 %v154, %v153
    %v156 = vmul.f32 0.5, %v155
    %v157 = vsub.f32 1.5, %v156
    %v158 = vmul.f32 %v153, %v157
    %vm159 = vweird.f32 %v152
    %vm160 = vweird.f32 %v153
    %vm161 = vmor %vm159, %vm160
    %v162 = vsel %vm161, %v153, %v158
    %v163 = vmul.f32 %v151, %v162
    %v164 = vld [vmem:[%s4] sm:$0x1]
    %v165 = vmul.f32 %v139, %v163
    %v166 = vsub.f32 %v164, %v165
    %v168 = vperm.slane %v163, 0
    %v170 = vmul.f32 %v130, %v168
    %v172 = vperm.slane %v166, 0
    %v174 = vadd.f32 %v170, %v172
    %v175 = vmax.f32 %v174, 0.0
    %v176 = vpack.c.bf16 %v175, %v175
    %177 = vst [vmem:[#allocation7] sm:$0xf] %v176
    // Predicated region
    $region30: #{tpu_custom_call.1} parent=1 // pred_check
      _
    $region31: #{tpu_custom_call.1} parent=1 // pred_check_branch
      %179 = sbr.rel (0) target = $region33
    $region32: #{tpu_custom_call.1} parent=1 // pred_region
      %181 = vsyncadd [#allocation4], 0
      %s183 = sshll.u32 [#allocation7], 4
      %s184 = int_to_ptr.vmem [resolvable:$true] %s183
      %s185 = sshll.u32 %s5, 4
      %s186 = int_to_ptr.hbm [resolvable:$true] %s185
      %188 = dma.vmem_to_hbm [thread:$0]  %s184, 64, %s186, [#allocation4]
    $region33: #{tpu_custom_call.1} parent=1 // pred_fallthru
      _
    // Predicated region
    $region34: #{tpu_custom_call.1} parent=1 // pred_check
      _
    $region35: #{tpu_custom_call.1} parent=1 // pred_check_branch
      %190 = sbr.rel (0) target = $region37
    $region36: #{tpu_custom_call.1} parent=1 // pred_region
      %192 = dma.done [#allocation4], 64
    $region37: #{tpu_custom_call.1} parent=1 // pred_fallthru
      _
    %193 = vsyncpa [#allocation3], 1
    %194 = vsyncpa [#allocation6], 1
    %195 = vsyncpa [#allocation4], 1

</llo_original>
